<compile_context>
chip_gen: v5e
topology: v5e:2x2
jax: 0.10.0
libtpu: 0.0.40
codegen_flags: <defaults>
</compile_context>

<pallas_src>
import jax
import jax.numpy as jnp
from jax import lax
from jax.experimental import pallas as pl
from jax.experimental.pallas import tpu as pltpu


def critic_kernel(obs_ref, act_ref, w1o_ref, w1a_ref, b1_ref,
                  w2_ref, b2_ref, w3_ref, b3_ref, out_ref):
    # Layer 1: split matmul over the two streamed inputs (no concat copy).
    h1 = jnp.dot(obs_ref[...], w1o_ref[...], preferred_element_type=jnp.float32)
    h1 = h1 + jnp.dot(act_ref[...], w1a_ref[...], preferred_element_type=jnp.float32)
    h1 = jnp.maximum(h1 + b1_ref[...], 0.0)
    # Layer 2.
    h2 = jnp.dot(h1.astype(w2_ref.dtype), w2_ref[...],
                 preferred_element_type=jnp.float32)
    h2 = jnp.maximum(h2 + b2_ref[...], 0.0)
    # Output head: w3 is a (1, hidden) row. Contract `hidden` on both operands
    # so the result is already a lane-dense (1, tile_b) row of Q values — no
    # 128-wide zero-padded output slab, no big in-kernel transpose.
    q = lax.dot_general(w3_ref[...], h2.astype(w3_ref.dtype),
                        dimension_numbers=(((1,), (1,)), ((), ())),
                        preferred_element_type=jnp.float32)
    out_ref[...] = (q + b3_ref[...]).astype(out_ref.dtype)


def _round_up(x, m):
    return ((x + m - 1) // m) * m


def _choose_tile_b(batch_rows, max_tile_b=1024, min_tile_b=128):
    """Largest 128-multiple tile <= max_tile_b, keeping >=2 tiles when possible
    so the "parallel" batch axis can use both TensorCores on v7x."""
    b128 = _round_up(max(batch_rows, 1), min_tile_b)
    tile = min(max_tile_b, b128)
    if b128 >= 2 * min_tile_b:
        half = max(min_tile_b, (b128 // 2) // min_tile_b * min_tile_b)
        tile = min(tile, half)
    return tile


def critic_forward(observations, actions, params, *,
                   max_tile_b=1024, use_bf16=True, weight_buffers=None):
    """Fused forward pass of CriticFunction (squeeze_output=True, layer_norm=False).

    Supports the 2-D actions case and the "multiple actions" case
    (actions.ndim == 3 with observations.ndim == 2), mirroring the torch module.
    """
    w1, b1, w2, b2, w3, b3 = params

    multiple_actions = False
    batch_size = observations.shape[0]
    if actions.ndim == 3 and observations.ndim == 2:
        multiple_actions = True
        n_rep = actions.shape[1]
        # TODO(synk): avoid materialising the repeated observations (index_map
        # row-sharing per the perf review); requires tile_b % n_rep == 0 plus an
        # in-kernel sublane repeat — skipped here for lowering robustness.
        observations = jnp.repeat(observations[:, None, :], n_rep, axis=1)
        observations = observations.reshape(-1, observations.shape[-1])
        actions = actions.reshape(-1, actions.shape[-1])

    B, obs_dim = observations.shape
    act_dim = actions.shape[-1]
    hidden = w1.shape[1]
    assert w1.shape[0] == obs_dim + act_dim

    tile_b = _choose_tile_b(B, max_tile_b=max_tile_b)
    n_tiles = pl.cdiv(B, tile_b)
    b_pad = n_tiles * tile_b
    if b_pad != B:
        # Only ragged batch sizes pay this small pad copy (powers of two don't).
        observations = jnp.pad(observations, ((0, b_pad - B), (0, 0)))
        actions = jnp.pad(actions, ((0, b_pad - B), (0, 0)))

    # Split w1 so layer 1 consumes obs / act directly (no fused-input concat).
    w1_obs, w1_act = w1[:obs_dim], w1[obs_dim:]
    w3_row = w3.reshape(1, hidden)          # (hidden, 1) -> (1, hidden) row
    b3_sc = b3.reshape(1, 1).astype(jnp.float32)
    b1_in = b1.reshape(1, hidden).astype(jnp.float32)
    b2_in = b2.reshape(1, hidden).astype(jnp.float32)

    # bf16 matmul operands (f32 accumulate, f32 biases) by default for v6e/v7x;
    # f32 operands when an exact numeric check is needed (or on v5e training).
    mm_dtype = jnp.bfloat16 if use_bf16 else jnp.float32
    obs_in = observations.astype(mm_dtype)
    act_in = actions.astype(mm_dtype)
    w1o_in = w1_obs.astype(mm_dtype)
    w1a_in = w1_act.astype(mm_dtype)
    w2_in = w2.astype(mm_dtype)
    w3_in = w3_row.astype(mm_dtype)

    def resident_spec(shape):
        # Constant-index blocks: weights stay resident in VMEM across the grid.
        if weight_buffers is None:
            return pl.BlockSpec(shape, lambda i: (0, 0))
        # Set weight_buffers=1 at large hidden sizes to drop the redundant
        # second buffer on these never-changing blocks (VMEM savings).
        return pl.BlockSpec(shape, lambda i: (0, 0),
                            pipeline_mode=pl.Buffered(weight_buffers))

    in_specs = [
        pl.BlockSpec((tile_b, obs_dim), lambda i: (i, 0)),   # obs tile (streamed)
        pl.BlockSpec((tile_b, act_dim), lambda i: (i, 0)),   # act tile (streamed)
        resident_spec((obs_dim, hidden)),                    # w1_obs
        resident_spec((act_dim, hidden)),                    # w1_act
        resident_spec((1, hidden)),                          # b1
        resident_spec((hidden, hidden)),                     # w2
        resident_spec((1, hidden)),                          # b2
        resident_spec((1, hidden)),                          # w3 (row)
        resident_spec((1, 1)),                               # b3
    ]
    out_specs = pl.BlockSpec((1, tile_b), lambda i: (0, i))  # lane-dense Q row

    # Scheduling hint for XLA (real flops / bytes, not the padded slab).
    flops = 2 * b_pad * hidden * (obs_dim + act_dim + hidden + 1)
    in_bytes = sum(int(a.size) * a.dtype.itemsize
                   for a in (obs_in, act_in, w1o_in, w1a_in, b1_in,
                             w2_in, b2_in, w3_in, b3_sc))
    out_bytes = b_pad * 4
    cost = pl.CostEstimate(flops=int(flops), transcendentals=0,
                           bytes_accessed=int(in_bytes + out_bytes))

    # Explicit VMEM budget derived from the actual tile footprint, capped at
    # v7x's 64 MiB physical VMEM so the tiling ports across generations.
    itemsize = jnp.dtype(mm_dtype).itemsize
    stream_bytes = tile_b * (obs_dim + act_dim) * itemsize + tile_b * 4
    weight_bytes = ((w1o_in.size + w1a_in.size + w2_in.size + w3_in.size) * itemsize
                    + (b1_in.size + b2_in.size + b3_sc.size) * 4)
    needed = 4 * stream_bytes + 2 * weight_bytes + (2 << 20)
    vmem_limit = int(min(64 * 2 ** 20, max(32 * 2 ** 20, needed)))

    out = pl.pallas_call(
        critic_kernel,
        out_shape=jax.ShapeDtypeStruct((1, b_pad), jnp.float32),
        grid_spec=pltpu.PrefetchScalarGridSpec(
            num_scalar_prefetch=0,
            grid=(n_tiles,),
            in_specs=in_specs,
            out_specs=out_specs,
        ),
        compiler_params=pltpu.CompilerParams(
            dimension_semantics=("parallel",),   # batch tiles independent
            vmem_limit_bytes=vmem_limit,
        ),
        cost_estimate=cost,
    )(obs_in, act_in, w1o_in, w1a_in, b1_in, w2_in, b2_in, w3_in, b3_sc)

    q_values = out[0, :B]                       # drop padded lanes
    if multiple_actions:
        q_values = q_values.reshape(batch_size, -1)
    return q_values


def init_params(key, observation_dim, action_dim, hidden_dim):
    """Orthogonal weights (gain=1.0), zero biases — mirrors orthogonal_net().
    Weights stored [in, out] so each layer is y = x @ W + b (== torch x @ W.T)."""
    in_dim = observation_dim + action_dim
    k1, k2, k3 = jax.random.split(key, 3)
    ortho = jax.nn.initializers.orthogonal(scale=1.0)
    w1 = ortho(k1, (in_dim, hidden_dim), jnp.float32)
    w2 = ortho(k2, (hidden_dim, hidden_dim), jnp.float32)
    w3 = ortho(k3, (hidden_dim, 1), jnp.float32)
    b1 = jnp.zeros((1, hidden_dim), jnp.float32)
    b2 = jnp.zeros((1, hidden_dim), jnp.float32)
    b3 = jnp.zeros((1, 1), jnp.float32)
    return w1, b1, w2, b2, w3, b3


def critic_reference(observations, actions, params):
    """Plain-JAX reference matching the torch CriticFunction forward."""
    w1, b1, w2, b2, w3, b3 = params
    hp = lax.Precision.HIGHEST
    multiple_actions = False
    batch_size = observations.shape[0]
    if actions.ndim == 3 and observations.ndim == 2:
        multiple_actions = True
        n_rep = actions.shape[1]
        observations = jnp.repeat(observations[:, None, :], n_rep, axis=1)
        observations = observations.reshape(-1, observations.shape[-1])
        actions = actions.reshape(-1, actions.shape[-1])
    x = jnp.concatenate([observations, actions], axis=-1)
    h1 = jnp.maximum(jnp.dot(x, w1, precision=hp) + b1, 0.0)
    h2 = jnp.maximum(jnp.dot(h1, w2, precision=hp) + b2, 0.0)
    q = (jnp.dot(h2, w3, precision=hp) + b3)[:, 0]
    if multiple_actions:
        q = q.reshape(batch_size, -1)
    return q


if __name__ == "__main__":
    # Small shapes consistent with CriticFunction(observation_dim, action_dim,
    # hidden_dim, n_hidden=2, squeeze_output=True): Q(s, a) -> [batch].
    batch, obs_dim, act_dim, hidden_dim = 2, 17, 6, 128

    key = jax.random.PRNGKey(0)
    k_obs, k_act, k_act3, k_params, k_bias, k_big = jax.random.split(key, 6)
    observations = jax.random.normal(k_obs, (batch, obs_dim), dtype=jnp.float32)
    actions = jax.random.normal(k_act, (batch, act_dim), dtype=jnp.float32)
    w1, b1, w2, b2, w3, b3 = init_params(k_params, obs_dim, act_dim, hidden_dim)
    # Perturb the (spec-default zero) biases so broadcast-add paths are exercised.
    kb1, kb2, kb3 = jax.random.split(k_bias, 3)
    b1 = 0.1 * jax.random.normal(kb1, b1.shape, dtype=jnp.float32)
    b2 = 0.1 * jax.random.normal(kb2, b2.shape, dtype=jnp.float32)
    b3 = 0.1 * jax.random.normal(kb3, b3.shape, dtype=jnp.float32)
    params = (w1, b1, w2, b2, w3, b3)

    # Case 1: standard 2-D actions -> q of shape [batch] (exact f32 path).
    q = jax.block_until_ready(critic_forward(observations, actions, params,
                                             use_bf16=False))
    q_ref = critic_reference(observations, actions, params)
    assert q.shape == (batch,)
    assert jnp.allclose(q, q_ref, atol=1e-4, rtol=1e-4)

    # Case 2: "multiple actions" (actions [batch, n, act_dim]) -> q [batch, n].
    n_act = 3
    actions3 = jax.random.normal(k_act3, (batch, n_act, act_dim), dtype=jnp.float32)
    q3 = jax.block_until_ready(critic_forward(observations, actions3, params,
                                              use_bf16=False))
    q3_ref = critic_reference(observations, actions3, params)
    assert q3.shape == (batch, n_act)
    assert jnp.allclose(q3, q3_ref, atol=1e-4, rtol=1e-4)

    # Case 3: ragged multi-tile batch (grid > 1, batch padding) in f32, plus the
    # default bf16-operand path (f32 accumulate) with a looser tolerance.
    big_b = 260
    k_bo, k_ba = jax.random.split(k_big, 2)
    obs_big = jax.random.normal(k_bo, (big_b, obs_dim), dtype=jnp.float32)
    act_big = jax.random.normal(k_ba, (big_b, act_dim), dtype=jnp.float32)
    qb_ref = critic_reference(obs_big, act_big, params)
    qb32 = jax.block_until_ready(critic_forward(obs_big, act_big, params,
                                                use_bf16=False))
    assert qb32.shape == (big_b,)
    assert jnp.allclose(qb32, qb_ref, atol=1e-4, rtol=1e-4)
    qb16 = jax.block_until_ready(critic_forward(obs_big, act_big, params))  # bf16
    assert qb16.shape == (big_b,)
    assert jnp.allclose(qb16, qb_ref, atol=0.2, rtol=0.05)

    print("KERNEL_OK")
</pallas_src>

<mosaic_0001>
module attributes {stable_mosaic.version = 11 : i64} {
  func.func @critic_kernel(%arg0: i32, %arg1: memref<128x17xf32, #tpu.memory_space<vmem>>, %arg2: memref<128x6xf32, #tpu.memory_space<vmem>>, %arg3: memref<17x128xf32, #tpu.memory_space<vmem>>, %arg4: memref<6x128xf32, #tpu.memory_space<vmem>>, %arg5: memref<1x128xf32, #tpu.memory_space<vmem>>, %arg6: memref<128x128xf32, #tpu.memory_space<vmem>>, %arg7: memref<1x128xf32, #tpu.memory_space<vmem>>, %arg8: memref<1x128xf32, #tpu.memory_space<vmem>>, %arg9: memref<1x1xf32, #tpu.memory_space<vmem>>, %arg10: memref<1x128xf32, #tpu.memory_space<vmem>>) attributes {dimension_semantics = [#tpu.dimension_semantics<parallel>], iteration_bounds = array<i64: 1>, scalar_prefetch = 0 : i64, scratch_operands = 0 : i64, tpu.core_type = #tpu.core_type<tc>, window_params = [{transform_indices = @transform_0, window_bounds = array<i64: 128, 17>}, {transform_indices = @transform_1, window_bounds = array<i64: 128, 6>}, {pipeline_mode = #tpu.pipeline_mode<synchronous>, transform_indices = @transform_2, window_bounds = array<i64: 17, 128>}, {pipeline_mode = #tpu.pipeline_mode<synchronous>, transform_indices = @transform_3, window_bounds = array<i64: 6, 128>}, {pipeline_mode = #tpu.pipeline_mode<synchronous>, transform_indices = @transform_4, window_bounds = array<i64: 1, 128>}, {pipeline_mode = #tpu.pipeline_mode<synchronous>, transform_indices = @transform_5, window_bounds = array<i64: 128, 128>}, {pipeline_mode = #tpu.pipeline_mode<synchronous>, transform_indices = @transform_6, window_bounds = array<i64: 1, 128>}, {pipeline_mode = #tpu.pipeline_mode<synchronous>, transform_indices = @transform_7, window_bounds = array<i64: 1, 128>}, {pipeline_mode = #tpu.pipeline_mode<synchronous>, transform_indices = @transform_8, window_bounds = array<i64: 1, 1>}, {transform_indices = @transform_9, window_bounds = array<i64: 1, 128>}]} {
    %c0 = arith.constant 0 : index
    %c0_0 = arith.constant 0 : index
    %0 = vector.load %arg1[%c0, %c0_0] : memref<128x17xf32, #tpu.memory_space<vmem>>, vector<128x17xf32>
    %c0_1 = arith.constant 0 : index
    %c0_2 = arith.constant 0 : index
    %1 = vector.load %arg3[%c0_1, %c0_2] : memref<17x128xf32, #tpu.memory_space<vmem>>, vector<17x128xf32>
    %cst = arith.constant dense<0.000000e+00> : vector<128x128xf32>
    %2 = tpu.matmul %0, %1, %cst {dimension_numbers = #tpu.dot_dimension_numbers<[1], [0], [0], [1], [0, 0, 1, 1], [], []>} : vector<128x17xf32>, vector<17x128xf32>, vector<128x128xf32> -> vector<128x128xf32>
    %c0_3 = arith.constant 0 : index
    %c0_4 = arith.constant 0 : index
    %3 = vector.load %arg2[%c0_3, %c0_4] : memref<128x6xf32, #tpu.memory_space<vmem>>, vector<128x6xf32>
    %c0_5 = arith.constant 0 : index
    %c0_6 = arith.constant 0 : index
    %4 = vector.load %arg4[%c0_5, %c0_6] : memref<6x128xf32, #tpu.memory_space<vmem>>, vector<6x128xf32>
    %cst_7 = arith.constant dense<0.000000e+00> : vector<128x128xf32>
    %5 = tpu.matmul %3, %4, %cst_7 {dimension_numbers = #tpu.dot_dimension_numbers<[1], [0], [0], [1], [0, 0, 1, 1], [], []>} : vector<128x6xf32>, vector<6x128xf32>, vector<128x128xf32> -> vector<128x128xf32>
    %6 = arith.addf %2, %5 : vector<128x128xf32>
    %c0_8 = arith.constant 0 : index
    %c0_9 = arith.constant 0 : index
    %7 = vector.load %arg5[%c0_8, %c0_9] : memref<1x128xf32, #tpu.memory_space<vmem>>, vector<1x128xf32>
    %8 = vector.broadcast %7 : vector<1x128xf32> to vector<128x128xf32>
    %9 = arith.addf %6, %8 : vector<128x128xf32>
    %cst_10 = arith.constant 0.000000e+00 : f32
    %10 = vector.broadcast %cst_10 : f32 to vector<128x128xf32>
    %11 = arith.maximumf %9, %10 : vector<128x128xf32>
    %c0_11 = arith.constant 0 : index
    %c0_12 = arith.constant 0 : index
    %12 = vector.load %arg6[%c0_11, %c0_12] : memref<128x128xf32, #tpu.memory_space<vmem>>, vector<128x128xf32>
    %cst_13 = arith.constant dense<0.000000e+00> : vector<128x128xf32>
    %13 = tpu.matmul %11, %12, %cst_13 {dimension_numbers = #tpu.dot_dimension_numbers<[1], [0], [0], [1], [0, 0, 1, 1], [], []>} : vector<128x128xf32>, vector<128x128xf32>, vector<128x128xf32> -> vector<128x128xf32>
    %c0_14 = arith.constant 0 : index
    %c0_15 = arith.constant 0 : index
    %14 = vector.load %arg7[%c0_14, %c0_15] : memref<1x128xf32, #tpu.memory_space<vmem>>, vector<1x128xf32>
    %15 = vector.broadcast %14 : vector<1x128xf32> to vector<128x128xf32>
    %16 = arith.addf %13, %15 : vector<128x128xf32>
    %cst_16 = arith.constant 0.000000e+00 : f32
    %17 = vector.broadcast %cst_16 : f32 to vector<128x128xf32>
    %18 = arith.maximumf %16, %17 : vector<128x128xf32>
    %c0_17 = arith.constant 0 : index
    %c0_18 = arith.constant 0 : index
    %19 = vector.load %arg8[%c0_17, %c0_18] : memref<1x128xf32, #tpu.memory_space<vmem>>, vector<1x128xf32>
    %cst_19 = arith.constant dense<0.000000e+00> : vector<1x128xf32>
    %20 = tpu.matmul %19, %18, %cst_19 {dimension_numbers = #tpu.dot_dimension_numbers<[1], [1], [0], [0], [0, 0, 1, 0], [], []>} : vector<1x128xf32>, vector<128x128xf32>, vector<1x128xf32> -> vector<1x128xf32>
    %c0_20 = arith.constant 0 : index
    %c0_21 = arith.constant 0 : index
    %21 = vector.load %arg9[%c0_20, %c0_21] : memref<1x1xf32, #tpu.memory_space<vmem>>, vector<1x1xf32>
    %22 = vector.broadcast %21 : vector<1x1xf32> to vector<1x128xf32>
    %23 = arith.addf %20, %22 : vector<1x128xf32>
    %c0_22 = arith.constant 0 : index
    %c0_23 = arith.constant 0 : index
    %24 = vector.load %arg10[%c0_22, %c0_23] : memref<1x128xf32, #tpu.memory_space<vmem>>, vector<1x128xf32>
    tpu.vector_store %arg10[%c0_22, %c0_23], %23 {strides = array<i32>} : memref<1x128xf32, #tpu.memory_space<vmem>>, vector<1x128xf32>,
    return
  }
  func.func @transform_0(%arg0: i32) -> (i32, i32) {
    %c0_i32 = arith.constant 0 : i32
    %c0_i32_0 = arith.constant 0 : i32
    return %arg0, %c0_i32 : i32, i32
  }
  func.func @transform_1(%arg0: i32) -> (i32, i32) {
    %c0_i32 = arith.constant 0 : i32
    %c0_i32_0 = arith.constant 0 : i32
    return %arg0, %c0_i32 : i32, i32
  }
  func.func @transform_2(%arg0: i32) -> (i32, i32) {
    %c0_i32 = arith.constant 0 : i32
    %c0_i32_0 = arith.constant 0 : i32
    %c0_i32_1 = arith.constant 0 : i32
    return %c0_i32, %c0_i32_0 : i32, i32
  }
  func.func @transform_3(%arg0: i32) -> (i32, i32) {
    %c0_i32 = arith.constant 0 : i32
    %c0_i32_0 = arith.constant 0 : i32
    %c0_i32_1 = arith.constant 0 : i32
    return %c0_i32, %c0_i32_0 : i32, i32
  }
  func.func @transform_4(%arg0: i32) -> (i32, i32) {
    %c0_i32 = arith.constant 0 : i32
    %c0_i32_0 = arith.constant 0 : i32
    %c0_i32_1 = arith.constant 0 : i32
    return %c0_i32, %c0_i32_0 : i32, i32
  }
  func.func @transform_5(%arg0: i32) -> (i32, i32) {
    %c0_i32 = arith.constant 0 : i32
    %c0_i32_0 = arith.constant 0 : i32
    %c0_i32_1 = arith.constant 0 : i32
    return %c0_i32, %c0_i32_0 : i32, i32
  }
  func.func @transform_6(%arg0: i32) -> (i32, i32) {
    %c0_i32 = arith.constant 0 : i32
    %c0_i32_0 = arith.constant 0 : i32
    %c0_i32_1 = arith.constant 0 : i32
    return %c0_i32, %c0_i32_0 : i32, i32
  }
  func.func @transform_7(%arg0: i32) -> (i32, i32) {
    %c0_i32 = arith.constant 0 : i32
    %c0_i32_0 = arith.constant 0 : i32
    %c0_i32_1 = arith.constant 0 : i32
    return %c0_i32, %c0_i32_0 : i32, i32
  }
  func.func @transform_8(%arg0: i32) -> (i32, i32) {
    %c0_i32 = arith.constant 0 : i32
    %c0_i32_0 = arith.constant 0 : i32
    %c0_i32_1 = arith.constant 0 : i32
    return %c0_i32, %c0_i32_0 : i32, i32
  }
  func.func @transform_9(%arg0: i32) -> (i32, i32) {
    %c0_i32 = arith.constant 0 : i32
    %c0_i32_0 = arith.constant 0 : i32
    return %c0_i32, %arg0 : i32, i32
  }
}

</mosaic_0001>

<llo_original>
// kernel: tpu_custom_call.1
$region0: #{tpu_custom_call.1}
  #allocation0 [shape = 'u32[]', space=smem, size = 0x4, offset = 0x4, fixed_abs, tag = 'smem constant byte address 0x4 - core index']
  #allocation1 [shape = 'u32[72,128]{1,0:T(1,128)}', space=vmem, size = 0x9000, scoped, tag = 'internal scratch']
  #allocation2 [shape = 'f32[1,1]{1,0:T(1,128)S(1)}', space=vmem, size = 0x200, scoped, tag = 'scoped memory for tpu_custom_call.1']
  %s0 = inlined_call_operand.vmem [shape: f32[128,17], index: 0, kind: input, shape index: {}]
  %s1 = inlined_call_operand.vmem [shape: f32[128,6], index: 1, kind: input, shape index: {}]
  %s2 = inlined_call_operand.vmem [shape: f32[17,128], index: 2, kind: input, shape index: {}]
  %s3 = inlined_call_operand.vmem [shape: f32[6,128], index: 3, kind: input, shape index: {}]
  %s4 = inlined_call_operand.vmem [shape: f32[1,128], index: 4, kind: input, shape index: {}]
  %s5 = inlined_call_operand.vmem [shape: f32[128,128], index: 5, kind: input, shape index: {}]
  %s6 = inlined_call_operand.vmem [shape: f32[1,128], index: 6, kind: input, shape index: {}]
  %s7 = inlined_call_operand.vmem [shape: f32[1,128], index: 7, kind: input, shape index: {}]
  %s8 = inlined_call_operand.<no memory space> [shape: f32[1,1], index: 8, kind: input, shape index: {}]
  %s9 = inlined_call_operand.hbm [shape: f32[1,128], index: 9, kind: output, shape index: {}]
  %s10 = sld [smem:[#allocation0]]
  $region46: #{tpu_custom_call.1} parent=0
    _
  %s12 = ssub.s32 1, %s10
  %s13 = scalar_select 0, %s12, %s10
  %v14 = vstv %s8
  %15 = vst [vmem:[#allocation2] sm:$0x1] %v14
  $region1: #{tpu_custom_call.1} parent=0
    #allocation3 [shape = 'u8[512]{0}', space=vmem, size = 0x400, scoped, tag = 'output window, operand 0, single buffered']
    #allocation4 [shape = 's32[1]{0}', space=sflag, size = 0x4, scoped, tag = 'scoped memory for tpu_custom_call.1']
    %16 = vsyncpa [#allocation4], 0
    // Predicated region
    $region2: #{tpu_custom_call.1} parent=1 // pred_check
      _
    $region3: #{tpu_custom_call.1} parent=1 // pred_check_branch
      %18 = sbr.rel (0) target = $region5
    $region4: #{tpu_custom_call.1} parent=1 // pred_region
      _
    $region5: #{tpu_custom_call.1} parent=1 // pred_fallthru
      _
    // Predicated region
    $region6: #{tpu_custom_call.1} parent=1 // pred_check
      _
    $region7: #{tpu_custom_call.1} parent=1 // pred_check_branch
      %20 = sbr.rel (0) target = $region9
    $region8: #{tpu_custom_call.1} parent=1 // pred_region
      _
    $region9: #{tpu_custom_call.1} parent=1 // pred_fallthru
      _
    // Predicated region
    $region10: #{tpu_custom_call.1} parent=1 // pred_check
      _
    $region11: #{tpu_custom_call.1} parent=1 // pred_check_branch
      %22 = sbr.rel (0) target = $region13
    $region12: #{tpu_custom_call.1} parent=1 // pred_region
      _
    $region13: #{tpu_custom_call.1} parent=1 // pred_fallthru
      _
    // Predicated region
    $region14: #{tpu_custom_call.1} parent=1 // pred_check
      _
    $region15: #{tpu_custom_call.1} parent=1 // pred_check_branch
      %24 = sbr.rel (0) target = $region17
    $region16: #{tpu_custom_call.1} parent=1 // pred_region
      _
    $region17: #{tpu_custom_call.1} parent=1 // pred_fallthru
      _
    // Predicated region
    $region18: #{tpu_custom_call.1} parent=1 // pred_check
      _
    $region19: #{tpu_custom_call.1} parent=1 // pred_check_branch
      %26 = sbr.rel (0) target = $region21
    $region20: #{tpu_custom_call.1} parent=1 // pred_region
      _
    $region21: #{tpu_custom_call.1} parent=1 // pred_fallthru
      _
    // Predicated region
    $region22: #{tpu_custom_call.1} parent=1 // pred_check
      _
    $region23: #{tpu_custom_call.1} parent=1 // pred_check_branch
      %28 = sbr.rel (0) target = $region25
    $region24: #{tpu_custom_call.1} parent=1 // pred_region
      _
    $region25: #{tpu_custom_call.1} parent=1 // pred_fallthru
      _
    // Predicated region
    $region26: #{tpu_custom_call.1} parent=1 // pred_check
      _
    $region27: #{tpu_custom_call.1} parent=1 // pred_check_branch
      %30 = sbr.rel (0) target = $region29
    $region28: #{tpu_custom_call.1} parent=1 // pred_region
      _
    $region29: #{tpu_custom_call.1} parent=1 // pred_fallthru
      _
    // Predicated region
    $region30: #{tpu_custom_call.1} parent=1 // pred_check
      _
    $region31: #{tpu_custom_call.1} parent=1 // pred_check_branch
      %32 = sbr.rel (0) target = $region33
    $region32: #{tpu_custom_call.1} parent=1 // pred_region
      _
    $region33: #{tpu_custom_call.1} parent=1 // pred_fallthru
      _
    // Predicated region
    $region34: #{tpu_custom_call.1} parent=1 // pred_check
      _
    $region35: #{tpu_custom_call.1} parent=1 // pred_check_branch
      %34 = sbr.rel (0) target = $region37
    $region36: #{tpu_custom_call.1} parent=1 // pred_region
      _
    $region37: #{tpu_custom_call.1} parent=1 // pred_fallthru
      _
    %v35 = vld [vmem:[%s0] sm:$0xff]
    %v36 = vld [vmem:[%s0 + $0x8] sm:$0xff]
    %v37 = vld [vmem:[%s0 + $0x10] sm:$0xff]
    %v38 = vld [vmem:[%s0 + $0x18] sm:$0xff]
    %v39 = vld [vmem:[%s0 + $0x20] sm:$0xff]
    %v40 = vld [vmem:[%s0 + $0x28] sm:$0xff]
    %v41 = vld [vmem:[%s0 + $0x30] sm:$0xff]
    %v42 = vld [vmem:[%s0 + $0x38] sm:$0xff]
    %v43 = vld [vmem:[%s0 + $0x40] sm:$0xff]
    %v44 = vld [vmem:[%s0 + $0x48] sm:$0xff]
    %v45 = vld [vmem:[%s0 + $0x50] sm:$0xff]
    %v46 = vld [vmem:[%s0 + $0x58] sm:$0xff]
    %v47 = vld [vmem:[%s0 + $0x60] sm:$0xff]
    %v48 = vld [vmem:[%s0 + $0x68] sm:$0xff]
    %v49 = vld [vmem:[%s0 + $0x70] sm:$0xff]
    %v50 = vld [vmem:[%s0 + $0x78] sm:$0xff]
    %v51 = vld [vmem:[%s2] sm:$0xff]
    %v52 = vld [vmem:[%s2 + $0x8] sm:$0xff]
    %v53 = vld [vmem:[%s2 + $0x10] sm:$0x1]
    %v54 = vld [vmem:[%s1] sm:$0xff]
    %v55 = vld [vmem:[%s1 + $0x8] sm:$0xff]
    %v56 = vld [vmem:[%s1 + $0x10] sm:$0xff]
    %v57 = vld [vmem:[%s1 + $0x18] sm:$0xff]
    %v58 = vld [vmem:[%s1 + $0x20] sm:$0xff]
    %v59 = vld [vmem:[%s1 + $0x28] sm:$0xff]
    %v60 = vld [vmem:[%s1 + $0x30] sm:$0xff]
    %v61 = vld [vmem:[%s1 + $0x38] sm:$0xff]
    %v62 = vld [vmem:[%s1 + $0x40] sm:$0xff]
    %v63 = vld [vmem:[%s1 + $0x48] sm:$0xff]
    %v64 = vld [vmem:[%s1 + $0x50] sm:$0xff]
    %v65 = vld [vmem:[%s1 + $0x58] sm:$0xff]
    %v66 = vld [vmem:[%s1 + $0x60] sm:$0xff]
    %v67 = vld [vmem:[%s1 + $0x68] sm:$0xff]
    %v68 = vld [vmem:[%s1 + $0x70] sm:$0xff]
    %v69 = vld [vmem:[%s1 + $0x78] sm:$0xff]
    %v70 = vld [vmem:[%s3] sm:$0x3f]
    %vm71 = vcmask 48128
    %v73 = vsel %vm71, %v54, 0
    %v76 = vsel %vm71, %v55, 0
    %v79 = vsel %vm71, %v56, 0
    %v82 = vsel %vm71, %v57, 0
    %v85 = vsel %vm71, %v58, 0
    %v88 = vsel %vm71, %v59, 0
    %v91 = vsel %vm71, %v60, 0
    %v94 = vsel %vm71, %v61, 0
    %v97 = vsel %vm71, %v62, 0
    %v100 = vsel %vm71, %v63, 0
    %v103 = vsel %vm71, %v64, 0
    %v106 = vsel %vm71, %v65, 0
    %v109 = vsel %vm71, %v66, 0
    %v112 = vsel %vm71, %v67, 0
    %v115 = vsel %vm71, %v68, 0
    %v118 = vsel %vm71, %v69, 0
    %vm120 = vcmask 1045504
    %v122 = vsel %vm120, %v70, 0
    %124 = vmatpush.msra.mxu0 0.0
    %125 = vmatpush.msra.mxu0 0.0
    %126 = vmatpush.msra.mxu0 0.0
    %127 = vmatpush.msra.mxu0 0.0
    %128 = vmatpush.msra.mxu0 0.0
    %129 = vmatpush.msra.mxu0 0.0
    %130 = vmatpush.msra.mxu0 0.0
    %131 = vmatpush.msra.mxu0 0.0
    %132 = vmatpush.msra.mxu0 0.0
    %133 = vmatpush.msra.mxu0 0.0
    %134 = vmatpush.msra.mxu0 0.0
    %135 = vmatpush.msra.mxu0 0.0
    %136 = vmatpush.msra.mxu0 0.0
    %137 = vmatpush.msra.mxu0 0.0
    %138 = vmatpush.msra.mxu0 0.0
    %139 = vmatpush.msra.mxu0 %v122
    %140 = vmatmul.f32.gmra.mxu0 %v73
    %v141 = vpop.f32.mrf.mxu0
    %v142 = vadd.f32 0.0, %v141
    %143 = vmatmul.f32.gmra.mxu0 %v76
    %v144 = vpop.f32.mrf.mxu0
    %v145 = vadd.f32 0.0, %v144
    %146 = vmatmul.f32.gmra.mxu0 %v79
    %v147 = vpop.f32.mrf.mxu0
    %v148 = vadd.f32 0.0, %v147
    %149 = vmatmul.f32.gmra.mxu0 %v82
    %v150 = vpop.f32.mrf.mxu0
    %v151 = vadd.f32 0.0, %v150
    %152 = vmatmul.f32.gmra.mxu0 %v85
    %v153 = vpop.f32.mrf.mxu0
    %v154 = vadd.f32 0.0, %v153
    %155 = vmatmul.f32.gmra.mxu0 %v88
    %v156 = vpop.f32.mrf.mxu0
    %v157 = vadd.f32 0.0, %v156
    %158 = vmatmul.f32.gmra.mxu0 %v91
    %v159 = vpop.f32.mrf.mxu0
    %v160 = vadd.f32 0.0, %v159
    %161 = vmatmul.f32.gmra.mxu0 %v94
    %v162 = vpop.f32.mrf.mxu0
    %v163 = vadd.f32 0.0, %v162
    %164 = vmatmul.f32.gmra.mxu0 %v97
    %v165 = vpop.f32.mrf.mxu0
    %v166 = vadd.f32 0.0, %v165
    %167 = vmatmul.f32.gmra.mxu0 %v100
    %v168 = vpop.f32.mrf.mxu0
    %v169 = vadd.f32 0.0, %v168
    %170 = vmatmul.f32.gmra.mxu0 %v103
    %v171 = vpop.f32.mrf.mxu0
    %v172 = vadd.f32 0.0, %v171
    %173 = vmatmul.f32.gmra.mxu0 %v106
    %v174 = vpop.f32.mrf.mxu0
    %v175 = vadd.f32 0.0, %v174
    %176 = vmatmul.f32.gmra.mxu0 %v109
    %v177 = vpop.f32.mrf.mxu0
    %v178 = vadd.f32 0.0, %v177
    %179 = vmatmul.f32.gmra.mxu0 %v112
    %v180 = vpop.f32.mrf.mxu0
    %v181 = vadd.f32 0.0, %v180
    %182 = vmatmul.f32.gmra.mxu0 %v115
    %v183 = vpop.f32.mrf.mxu0
    %v184 = vadd.f32 0.0, %v183
    %185 = vmatmul.f32.gmra.mxu0 %v118
    %v186 = vpop.f32.mrf.mxu0
    %v187 = vadd.f32 0.0, %v186
    %188 = vdwg.mxu0
    %vm189 = vcmask 138240
    %v191 = vsel %vm189, %v35, 0
    %v194 = vsel %vm189, %v36, 0
    %v197 = vsel %vm189, %v37, 0
    %v200 = vsel %vm189, %v38, 0
    %v203 = vsel %vm189, %v39, 0
    %v206 = vsel %vm189, %v40, 0
    %v209 = vsel %vm189, %v41, 0
    %v212 = vsel %vm189, %v42, 0
    %v215 = vsel %vm189, %v43, 0
    %v218 = vsel %vm189, %v44, 0
    %v221 = vsel %vm189, %v45, 0
    %v224 = vsel %vm189, %v46, 0
    %v227 = vsel %vm189, %v47, 0
    %v230 = vsel %vm189, %v48, 0
    %v233 = vsel %vm189, %v49, 0
    %v236 = vsel %vm189, %v50, 0
    %vm238 = vcmask 1040384
    %v240 = vsel %vm238, %v53, 0
    %242 = vmatpush.msra.mxu0 0.0
    %243 = vmatpush.msra.mxu0 0.0
    %244 = vmatpush.msra.mxu0 0.0
    %245 = vmatpush.msra.mxu0 0.0
    %246 = vmatpush.msra.mxu0 0.0
    %247 = vmatpush.msra.mxu0 0.0
    %248 = vmatpush.msra.mxu0 0.0
    %249 = vmatpush.msra.mxu0 0.0
    %250 = vmatpush.msra.mxu0 0.0
    %251 = vmatpush.msra.mxu0 0.0
    %252 = vmatpush.msra.mxu0 0.0
    %253 = vmatpush.msra.mxu0 0.0
    %254 = vmatpush.msra.mxu0 0.0
    %255 = vmatpush.msra.mxu0 %v240
    %256 = vmatpush.msra.mxu0 %v52
    %257 = vmatpush.msra.mxu0 %v51
    %258 = vmatmul.f32.gmra.mxu0 %v191
    %v259 = vpop.f32.mrf.mxu0
    %v260 = vadd.f32 %v142, %v259
    %261 = vmatmul.f32.gmra.mxu0 %v194
    %v262 = vpop.f32.mrf.mxu0
    %v263 = vadd.f32 %v145, %v262
    %264 = vmatmul.f32.gmra.mxu0 %v197
    %v265 = vpop.f32.mrf.mxu0
    %v266 = vadd.f32 %v148, %v265
    %267 = vmatmul.f32.gmra.mxu0 %v200
    %v268 = vpop.f32.mrf.mxu0
    %v269 = vadd.f32 %v151, %v268
    %270 = vmatmul.f32.gmra.mxu0 %v203
    %v271 = vpop.f32.mrf.mxu0
    %v272 = vadd.f32 %v154, %v271
    %273 = vmatmul.f32.gmra.mxu0 %v206
    %v274 = vpop.f32.mrf.mxu0
    %v275 = vadd.f32 %v157, %v274
    %276 = vmatmul.f32.gmra.mxu0 %v209
    %v277 = vpop.f32.mrf.mxu0
    %v278 = vadd.f32 %v160, %v277
    %279 = vmatmul.f32.gmra.mxu0 %v212
    %v280 = vpop.f32.mrf.mxu0
    %v281 = vadd.f32 %v163, %v280
    %282 = vmatmul.f32.gmra.mxu0 %v215
    %v283 = vpop.f32.mrf.mxu0
    %v284 = vadd.f32 %v166, %v283
    %285 = vmatmul.f32.gmra.mxu0 %v218
    %v286 = vpop.f32.mrf.mxu0
    %v287 = vadd.f32 %v169, %v286
    %288 = vmatmul.f32.gmra.mxu0 %v221
    %v289 = vpop.f32.mrf.mxu0
    %v290 = vadd.f32 %v172, %v289
    %291 = vmatmul.f32.gmra.mxu0 %v224
    %v292 = vpop.f32.mrf.mxu0
    %v293 = vadd.f32 %v175, %v292
    %294 = vmatmul.f32.gmra.mxu0 %v227
    %v295 = vpop.f32.mrf.mxu0
    %v296 = vadd.f32 %v178, %v295
    %297 = vmatmul.f32.gmra.mxu0 %v230
    %v298 = vpop.f32.mrf.mxu0
    %v299 = vadd.f32 %v181, %v298
    %300 = vmatmul.f32.gmra.mxu0 %v233
    %v301 = vpop.f32.mrf.mxu0
    %v302 = vadd.f32 %v184, %v301
    %303 = vmatmul.f32.gmra.mxu0 %v236
    %v304 = vpop.f32.mrf.mxu0
    %v305 = vadd.f32 %v187, %v304
    %306 = vdwg.mxu0
    %v307 = vld [vmem:[%s4] sm:$0x1]
    %v309 = vperm.slane %v307, 0
    %v311 = vadd.f32 %v260, %v309
    %v312 = vadd.f32 %v263, %v309
    %v313 = vadd.f32 %v266, %v309
    %v314 = vadd.f32 %v269, %v309
    %v315 = vadd.f32 %v272, %v309
    %v316 = vadd.f32 %v275, %v309
    %v317 = vadd.f32 %v278, %v309
    %v318 = vadd.f32 %v281, %v309
    %v319 = vadd.f32 %v284, %v309
    %v320 = vadd.f32 %v287, %v309
    %v321 = vadd.f32 %v290, %v309
    %v322 = vadd.f32 %v293, %v309
    %v323 = vadd.f32 %v296, %v309
    %v324 = vadd.f32 %v299, %v309
    %v325 = vadd.f32 %v302, %v309
    %v326 = vadd.f32 %v305, %v309
    %v327 = vmax.f32 %v311, 0.0
    %v328 = vmax.f32 %v312, 0.0
    %v329 = vmax.f32 %v313, 0.0
    %v330 = vmax.f32 %v314, 0.0
    %v331 = vmax.f32 %v315, 0.0
    %v332 = vmax.f32 %v316, 0.0
    %v333 = vmax.f32 %v317, 0.0
    %v334 = vmax.f32 %v318, 0.0
    %v335 = vmax.f32 %v319, 0.0
    %v336 = vmax.f32 %v320, 0.0
    %v337 = vmax.f32 %v321, 0.0
    %v338 = vmax.f32 %v322, 0.0
    %v339 = vmax.f32 %v323, 0.0
    %v340 = vmax.f32 %v324, 0.0
    %v341 = vmax.f32 %v325, 0.0
    %v342 = vmax.f32 %v326, 0.0
    %v343 = vld [vmem:[%s5] sm:$0xff]
    %v344 = vld [vmem:[%s5 + $0x8] sm:$0xff]
    %v345 = vld [vmem:[%s5 + $0x10] sm:$0xff]
    %v346 = vld [vmem:[%s5 + $0x18] sm:$0xff]
    %v347 = vld [vmem:[%s5 + $0x20] sm:$0xff]
    %v348 = vld [vmem:[%s5 + $0x28] sm:$0xff]
    %v349 = vld [vmem:[%s5 + $0x30] sm:$0xff]
    %v350 = vld [vmem:[%s5 + $0x38] sm:$0xff]
    %v351 = vld [vmem:[%s5 + $0x40] sm:$0xff]
    %v352 = vld [vmem:[%s5 + $0x48] sm:$0xff]
    %v353 = vld [vmem:[%s5 + $0x50] sm:$0xff]
    %v354 = vld [vmem:[%s5 + $0x58] sm:$0xff]
    %v355 = vld [vmem:[%s5 + $0x60] sm:$0xff]
    %v356 = vld [vmem:[%s5 + $0x68] sm:$0xff]
    %v357 = vld [vmem:[%s5 + $0x70] sm:$0xff]
    %v358 = vld [vmem:[%s5 + $0x78] sm:$0xff]
    %v359 = vld [vmem:[%s6] sm:$0x1]
    %v361 = vperm.slane %v359, 0
    %363 = vmatpush.msra.mxu0 %v358
    %364 = vmatpush.msra.mxu0 %v357
    %365 = vmatpush.msra.mxu0 %v356
    %366 = vmatpush.msra.mxu0 %v355
    %367 = vmatpush.msra.mxu0 %v354
    %368 = vmatpush.msra.mxu0 %v353
    %369 = vmatpush.msra.mxu0 %v352
    %370 = vmatpush.msra.mxu0 %v351
    %371 = vmatpush.msra.mxu0 %v350
    %372 = vmatpush.msra.mxu0 %v349
    %373 = vmatpush.msra.mxu0 %v348
    %374 = vmatpush.msra.mxu0 %v347
    %375 = vmatpush.msra.mxu0 %v346
    %376 = vmatpush.msra.mxu0 %v345
    %377 = vmatpush.msra.mxu0 %v344
    %378 = vmatpush.msra.mxu0 %v343
    %379 = vmatmul.f32.gmra.mxu0 %v327
    %v380 = vpop.f32.mrf.mxu0
    %v381 = vadd.f32 %v361, %v380
    %382 = vmatmul.f32.gmra.mxu0 %v328
    %v383 = vpop.f32.mrf.mxu0
    %v384 = vadd.f32 %v361, %v383
    %385 = vmatmul.f32.gmra.mxu0 %v329
    %v386 = vpop.f32.mrf.mxu0
    %v387 = vadd.f32 %v361, %v386
    %388 = vmatmul.f32.gmra.mxu0 %v330
    %v389 = vpop.f32.mrf.mxu0
    %v390 = vadd.f32 %v361, %v389
    %391 = vmatmul.f32.gmra.mxu0 %v331
    %v392 = vpop.f32.mrf.mxu0
    %v393 = vadd.f32 %v361, %v392
    %394 = vmatmul.f32.gmra.mxu0 %v332
    %v395 = vpop.f32.mrf.mxu0
    %v396 = vadd.f32 %v361, %v395
    %397 = vmatmul.f32.gmra.mxu0 %v333
    %v398 = vpop.f32.mrf.mxu0
    %v399 = vadd.f32 %v361, %v398
    %400 = vmatmul.f32.gmra.mxu0 %v334
    %v401 = vpop.f32.mrf.mxu0
    %v402 = vadd.f32 %v361, %v401
    %403 = vmatmul.f32.gmra.mxu0 %v335
    %v404 = vpop.f32.mrf.mxu0
    %v405 = vadd.f32 %v361, %v404
    %406 = vmatmul.f32.gmra.mxu0 %v336
    %v407 = vpop.f32.mrf.mxu0
    %v408 = vadd.f32 %v361, %v407
    %409 = vmatmul.f32.gmra.mxu0 %v337
    %v410 = vpop.f32.mrf.mxu0
    %v411 = vadd.f32 %v361, %v410
    %412 = vmatmul.f32.gmra.mxu0 %v338
    %v413 = vpop.f32.mrf.mxu0
    %v414 = vadd.f32 %v361, %v413
    %415 = vmatmul.f32.gmra.mxu0 %v339
    %v416 = vpop.f32.mrf.mxu0
    %v417 = vadd.f32 %v361, %v416
    %418 = vmatmul.f32.gmra.mxu0 %v340
    %v419 = vpop.f32.mrf.mxu0
    %v420 = vadd.f32 %v361, %v419
    %421 = vmatmul.f32.gmra.mxu0 %v341
    %v422 = vpop.f32.mrf.mxu0
    %v423 = vadd.f32 %v361, %v422
    %424 = vmatmul.f32.gmra.mxu0 %v342
    %v425 = vpop.f32.mrf.mxu0
    %v426 = vadd.f32 %v361, %v425
    %427 = vdwg.mxu0
    %v428 = vmax.f32 %v381, 0.0
    %v429 = vmax.f32 %v384, 0.0
    %v430 = vmax.f32 %v387, 0.0
    %v431 = vmax.f32 %v390, 0.0
    %v432 = vmax.f32 %v393, 0.0
    %v433 = vmax.f32 %v396, 0.0
    %v434 = vmax.f32 %v399, 0.0
    %v435 = vmax.f32 %v402, 0.0
    %v436 = vmax.f32 %v405, 0.0
    %v437 = vmax.f32 %v408, 0.0
    %v438 = vmax.f32 %v411, 0.0
    %v439 = vmax.f32 %v414, 0.0
    %v440 = vmax.f32 %v417, 0.0
    %v441 = vmax.f32 %v420, 0.0
    %v442 = vmax.f32 %v423, 0.0
    %v443 = vmax.f32 %v426, 0.0
    %v444 = vld [vmem:[%s7] sm:$0x1]
    %v445 = vld [vmem:[#allocation2] sm:$0x1]
    %447 = vset.pattern.permute.xlu0 0
    %448 = vperm.xlu0 %447, %v445
    %v449 = vpop.permute.xlu0 %448
    %v451 = vperm.slane %v449, 0
    %452 = vmatpush.xpose.msra.mxu0 %v443
    %453 = vmatpush.xpose.msra.mxu0 %v442
    %454 = vmatpush.xpose.msra.mxu0 %v441
    %455 = vmatpush.xpose.msra.mxu0 %v440
    %456 = vmatpush.xpose.msra.mxu0 %v439
    %457 = vmatpush.xpose.msra.mxu0 %v438
    %458 = vmatpush.xpose.msra.mxu0 %v437
    %459 = vmatpush.xpose.msra.mxu0 %v436
    %460 = vmatpush.xpose.msra.mxu0 %v435
    %461 = vmatpush.xpose.msra.mxu0 %v434
    %462 = vmatpush.xpose.msra.mxu0 %v433
    %463 = vmatpush.xpose.msra.mxu0 %v432
    %464 = vmatpush.xpose.msra.mxu0 %v431
    %465 = vmatpush.xpose.msra.mxu0 %v430
    %466 = vmatpush.xpose.msra.mxu0 %v429
    %467 = vmatpush.xpose.msra.mxu0 %v428
    %468 = vmatmul.f32.gmra.mxu0 %v444
    %v469 = vpop.f32.mrf.mxu0
    %v470 = vadd.f32 %v451, %v469
    %471 = vdwg.mxu0
    %472 = vst [vmem:[#allocation3] sm:$0x1] %v470
    // Predicated region
    $region38: #{tpu_custom_call.1} parent=1 // pred_check
      _
    $region39: #{tpu_custom_call.1} parent=1 // pred_check_branch
      %474 = sbr.rel (0) target = $region41
    $region40: #{tpu_custom_call.1} parent=1 // pred_region
      %476 = vsyncadd [#allocation4], 0
      %s478 = sshll.u32 [#allocation3], 4
      %s479 = int_to_ptr.vmem [resolvable:$true] %s478
      %s480 = sshll.u32 %s9, 4
      %s481 = int_to_ptr.hbm [resolvable:$true] %s480
      %483 = dma.vmem_to_hbm [thread:$0]  %s479, 16, %s481, [#allocation4]
    $region41: #{tpu_custom_call.1} parent=1 // pred_fallthru
      _
    // Predicated region
    $region42: #{tpu_custom_call.1} parent=1 // pred_check
      _
    $region43: #{tpu_custom_call.1} parent=1 // pred_check_branch
      %485 = sbr.rel (0) target = $region45
    $region44: #{tpu_custom_call.1} parent=1 // pred_region
      %487 = dma.done [#allocation4], 16
    $region45: #{tpu_custom_call.1} parent=1 // pred_fallthru
      _
    %488 = vsyncpa [#allocation4], 1

</llo_original>
